<compile_context>
chip_gen: v6e
topology: v6e:2x2x1
jax: 0.10.0
libtpu: 0.0.40
codegen_flags: <defaults>
</compile_context>

<pallas_src>
import functools

import jax
import jax.numpy as jnp
from jax.experimental import pallas as pl
from jax.experimental.pallas import tpu as pltpu


_LANES = 128
_SUBLANES = 8


def _kld_kernel(mu_ref, lv_ref, out_ref, acc_ref, *,
                scale, rows_valid, tile_rows, acc_rows, tiles_per_split,
                mask_rows):
    """Grid: (split [parallel across TCs], tile [arbitrary / reduction])."""
    i = pl.program_id(0)          # split index
    j = pl.program_id(1)          # reduction step within the split

    @pl.when(j == 0)
    def _init():
        acc_ref[...] = jnp.zeros_like(acc_ref)

    mu = mu_ref[...].astype(jnp.float32)
    lv = lv_ref[...].astype(jnp.float32)
    term = 1.0 + lv - mu * mu - jnp.exp(lv)        # VPU + EUP elementwise

    if mask_rows:
        # The final grid tile sticks out past the true row count; its
        # out-of-bounds rows hold undefined VMEM data and must be zeroed
        # before accumulation (jnp.where is a select, so NaN/Inf garbage in
        # the masked lanes cannot leak through).
        row0 = (i * tiles_per_split + j) * tile_rows
        local = jax.lax.broadcasted_iota(jnp.int32, (tile_rows, _LANES), 0)
        term = jnp.where(local < (rows_valid - row0), term, 0.0)

    # Fold the (tile_rows, 128) tile into a wider (acc_rows, 128) vector
    # accumulator with plain vreg adds (acc_rows independent add chains);
    # defer the expensive cross-lane/cross-sublane reduce to finalize.
    acc_ref[...] += term.reshape(-1, acc_rows, _LANES).sum(axis=0)

    @pl.when(j == pl.num_programs(1) - 1)
    def _finalize():
        out_ref[0, 0] = jnp.sum(acc_ref[...]) * jnp.float32(scale)


def _num_tensorcores():
    """Best-effort TensorCore count of the local chip (1 on any failure)."""
    try:
        info = pltpu.get_tpu_info()
    except Exception:
        return 1
    for name in ("num_cores", "num_tensorcores", "tensorcore_count",
                 "cores_per_chip", "num_cores_per_chip"):
        val = getattr(info, name, None)
        if isinstance(val, int) and val >= 1:
            return min(val, 2)
    return 1


def kld_loss_pallas(mu, logvar, *, max_tile_rows=4096):
    """mean_b(-0.5 * mean_d(1 + logvar - mu^2 - exp(logvar))) via Pallas."""
    b = mu.shape[0]
    n = mu.size
    d = n // b

    # Keep native dtype (bf16 welcome) over HBM; widen to f32 inside the kernel.
    mu_flat = mu.reshape(-1)
    lv_flat = logvar.reshape(-1)

    rows = pl.cdiv(n, _LANES)
    if n % _LANES:
        # Rare ragged tail (< 128 elements): tiny zero pad up to the next lane
        # boundary.  mu=0, logvar=0 contributes exactly 1 + 0 - 0 - exp(0) = 0.
        # TODO(synk): this path still copies the inputs once; it is only hit
        # when the flattened element count is not a multiple of 128.
        pad = rows * _LANES - n
        mu_flat = jnp.pad(mu_flat, (0, pad))
        lv_flat = jnp.pad(lv_flat, (0, pad))

    mu2 = mu_flat.reshape(rows, _LANES)   # free (layout-compatible) reshape
    lv2 = lv_flat.reshape(rows, _LANES)

    # Row-tile size: multiple of 8 sublanes, as large as the VMEM budget allows
    # (2 MiB f32 per input block) to amortize the ~0.35 us per-grid-step cost.
    if rows <= max_tile_rows:
        tile_rows = max(((rows + _SUBLANES - 1) // _SUBLANES) * _SUBLANES,
                        _SUBLANES)
    else:
        tile_rows = max_tile_rows

    n_tiles_total = pl.cdiv(rows, tile_rows)

    # Split the reduction across TensorCores only when the chip actually has
    # more than one (v7x); on single-TC chips (v5e/v6e) a second split is pure
    # overhead.  Only split when the tile count divides evenly so no grid
    # block is ever fully out of bounds.
    cores = _num_tensorcores()
    if cores > 1 and n_tiles_total % cores == 0 and n_tiles_total // cores >= 2:
        num_splits = cores
    else:
        num_splits = 1
    tiles_per_split = n_tiles_total // num_splits

    mask_rows = (rows % tile_rows) != 0
    acc_rows = 32 if tile_rows % 32 == 0 else _SUBLANES

    scale = -0.5 / float(b * d)           # ORIGINAL B*D, never a padded count

    kernel = functools.partial(
        _kld_kernel, scale=scale, rows_valid=rows, tile_rows=tile_rows,
        acc_rows=acc_rows, tiles_per_split=tiles_per_split,
        mask_rows=mask_rows)

    partials = pl.pallas_call(
        kernel,
        out_shape=jax.ShapeDtypeStruct((num_splits, 1), jnp.float32),
        grid_spec=pltpu.PrefetchScalarGridSpec(
            num_scalar_prefetch=0,
            grid=(num_splits, tiles_per_split),
            in_specs=[
                pl.BlockSpec((tile_rows, _LANES),
                             lambda i, j: (i * tiles_per_split + j, 0)),
                pl.BlockSpec((tile_rows, _LANES),
                             lambda i, j: (i * tiles_per_split + j, 0)),
            ],
            out_specs=pl.BlockSpec((1, 1), lambda i, j: (i, 0),
                                   memory_space=pltpu.SMEM),
            scratch_shapes=[pltpu.VMEM((acc_rows, _LANES), jnp.float32)],
        ),
        compiler_params=pltpu.CompilerParams(
            # TODO(synk): on v7x verify "parallel" shards axis 0 across the two
            # TensorCores; if not, switch to pltpu.CORE_PARALLEL / pl.core_map.
            dimension_semantics=("parallel", "arbitrary"),
            vmem_limit_bytes=32 * 1024 * 1024,
        ),
    )(mu2, lv2)
    return jnp.sum(partials)


def kld_loss_reference(mu, logvar):
    b = mu.shape[0]
    mu2 = mu.reshape(b, -1).astype(jnp.float32)
    lv2 = logvar.reshape(b, -1).astype(jnp.float32)
    per_sample = -0.5 * jnp.mean(1.0 + lv2 - mu2 ** 2 - jnp.exp(lv2), axis=1)
    return jnp.mean(per_sample, axis=0)


if __name__ == "__main__":
    key = jax.random.PRNGKey(0)

    cases = [
        ((2, 4, 16, 16), jnp.float32),   # aligned, single-tile fast path
        ((4, 3, 40, 40), jnp.float32),   # rows % tile != 0 -> in-kernel mask
        ((3, 5, 7, 9), jnp.float32),     # n % 128 != 0 -> tiny tail pad
    ]
    for idx, (shape, dtype) in enumerate(cases):
        k_mu, k_lv, k_out = jax.random.split(jax.random.fold_in(key, idx), 3)
        # `output` (the reconstruction) is unused by the KLD loss, matching torch.
        output = jax.random.normal(k_out, shape, dtype=dtype)
        mu = jax.random.normal(k_mu, shape, dtype=dtype)
        logvar = (0.1 * jax.random.normal(k_lv, shape)).astype(dtype)

        loss = kld_loss_pallas(mu, logvar)
        jax.block_until_ready(loss)

        ref = kld_loss_reference(mu, logvar)
        assert jnp.allclose(loss, ref, rtol=1e-5, atol=1e-6), (shape, loss, ref)

    # TODO(synk): `factor_kl` is never defined in the module's __init__; we
    # implement the factor_kl-truthy branch (the actual KLD computation).
    print("KERNEL_OK")
</pallas_src>

<mosaic_0001>
module attributes {stable_mosaic.version = 11 : i64} {
  func.func @_kld_kernel(%arg0: i32, %arg1: i32, %arg2: memref<16x128xf32, #tpu.memory_space<vmem>>, %arg3: memref<16x128xf32, #tpu.memory_space<vmem>>, %arg4: memref<1x1xf32, #tpu.memory_space<smem>>, %arg5: memref<8x128xf32, #tpu.memory_space<vmem>>) attributes {dimension_semantics = [#tpu.dimension_semantics<parallel>, #tpu.dimension_semantics<arbitrary>], iteration_bounds = array<i64: 1, 1>, scalar_prefetch = 0 : i64, scratch_operands = 1 : i64, tpu.core_type = #tpu.core_type<tc>, window_params = [{transform_indices = @transform_0, window_bounds = array<i64: 16, 128>}, {transform_indices = @transform_1, window_bounds = array<i64: 16, 128>}, {transform_indices = @transform_2, window_bounds = array<i64: 1, 1>}]} {
    %c0_i32 = arith.constant 0 : i32
    %0 = arith.cmpi eq, %arg1, %c0_i32 : i32
    %1 = arith.extui %0 : i1 to i32
    %c0_i32_0 = arith.constant 0 : i32
    %2 = arith.cmpi ne, %1, %c0_i32_0 : i32
    scf.if %2 {
      %cst_11 = arith.constant 0.000000e+00 : f32
      %19 = vector.broadcast %cst_11 : f32 to vector<8x128xf32>
      %c0_12 = arith.constant 0 : index
      %c0_13 = arith.constant 0 : index
      %20 = vector.load %arg5[%c0_12, %c0_13] : memref<8x128xf32, #tpu.memory_space<vmem>>, vector<8x128xf32>
      tpu.vector_store %arg5[%c0_12, %c0_13], %19 {strides = array<i32>} : memref<8x128xf32, #tpu.memory_space<vmem>>, vector<8x128xf32>,
    } else {
    }
    %c0 = arith.constant 0 : index
    %c0_1 = arith.constant 0 : index
    %3 = vector.load %arg2[%c0, %c0_1] : memref<16x128xf32, #tpu.memory_space<vmem>>, vector<16x128xf32>
    %c0_2 = arith.constant 0 : index
    %c0_3 = arith.constant 0 : index
    %4 = vector.load %arg3[%c0_2, %c0_3] : memref<16x128xf32, #tpu.memory_space<vmem>>, vector<16x128xf32>
    %cst = arith.constant 1.000000e+00 : f32
    %5 = vector.broadcast %cst : f32 to vector<16x128xf32>
    %6 = arith.addf %5, %4 : vector<16x128xf32>
    %7 = arith.mulf %3, %3 : vector<16x128xf32>
    %8 = arith.subf %6, %7 : vector<16x128xf32>
    %9 = math.exp %4 : vector<16x128xf32>
    %10 = arith.subf %8, %9 : vector<16x128xf32>
    %c0_4 = arith.constant 0 : index
    %c0_5 = arith.constant 0 : index
    %11 = vector.load %arg5[%c0_4, %c0_5] : memref<8x128xf32, #tpu.memory_space<vmem>>, vector<8x128xf32>
    %12 = vector.shape_cast %10 : vector<16x128xf32> to vector<2x8x128xf32>
    %cst_6 = arith.constant dense<0.000000e+00> : vector<8x128xf32>
    %13 = vector.multi_reduction <add>, %12, %cst_6 [0] : vector<2x8x128xf32> to vector<8x128xf32>
    %14 = arith.addf %11, %13 : vector<8x128xf32>
    %c0_7 = arith.constant 0 : index
    %c0_8 = arith.constant 0 : index
    %15 = vector.load %arg5[%c0_7, %c0_8] : memref<8x128xf32, #tpu.memory_space<vmem>>, vector<8x128xf32>
    tpu.vector_store %arg5[%c0_7, %c0_8], %14 {strides = array<i32>} : memref<8x128xf32, #tpu.memory_space<vmem>>, vector<8x128xf32>,
    %c0_i32_9 = arith.constant 0 : i32
    %16 = arith.cmpi eq, %arg1, %c0_i32_9 : i32
    %17 = arith.extui %16 : i1 to i32
    %c0_i32_10 = arith.constant 0 : i32
    %18 = arith.cmpi ne, %17, %c0_i32_10 : i32
    scf.if %18 {
      %c0_11 = arith.constant 0 : index
      %c0_12 = arith.constant 0 : index
      %19 = vector.load %arg5[%c0_11, %c0_12] : memref<8x128xf32, #tpu.memory_space<vmem>>, vector<8x128xf32>
      %20 = vector.shape_cast %19 : vector<8x128xf32> to vector<1x8x128xf32>
      %cst_13 = arith.constant dense<0.000000e+00> : vector<1xf32>
      %21 = vector.multi_reduction <add>, %20, %cst_13 [1, 2] : vector<1x8x128xf32> to vector<1xf32>
      %22 = vector.shape_cast %21 : vector<1xf32> to vector<1x1x1xf32>
      %23 = vector.extract %22[0, 0, 0] : f32 from vector<1x1x1xf32>
      %cst_14 = arith.constant -2.44140625E-4 : f32
      %24 = arith.mulf %23, %cst_14 : f32
      %c0_15 = arith.constant 0 : index
      %c0_16 = arith.constant 0 : index
      %25 = memref.load %arg4[%c0_15, %c0_16] : memref<1x1xf32, #tpu.memory_space<smem>>
      memref.store %24, %arg4[%c0_15, %c0_16] : memref<1x1xf32, #tpu.memory_space<smem>>
    } else {
    }
    return
  }
  func.func @transform_0(%arg0: i32, %arg1: i32) -> (i32, i32) {
    %c1_i32 = arith.constant 1 : i32
    %0 = arith.muli %arg0, %c1_i32 : i32
    %1 = arith.addi %0, %arg1 : i32
    %c0_i32 = arith.constant 0 : i32
    %c0_i32_0 = arith.constant 0 : i32
    return %1, %c0_i32 : i32, i32
  }
  func.func @transform_1(%arg0: i32, %arg1: i32) -> (i32, i32) {
    %c1_i32 = arith.constant 1 : i32
    %0 = arith.muli %arg0, %c1_i32 : i32
    %1 = arith.addi %0, %arg1 : i32
    %c0_i32 = arith.constant 0 : i32
    %c0_i32_0 = arith.constant 0 : i32
    return %1, %c0_i32 : i32, i32
  }
  func.func @transform_2(%arg0: i32, %arg1: i32) -> (i32, i32) {
    %c0_i32 = arith.constant 0 : i32
    %c0_i32_0 = arith.constant 0 : i32
    return %arg0, %c0_i32 : i32, i32
  }
}

</mosaic_0001>

<llo_original>
// kernel: tpu_custom_call.1
$region0: #{tpu_custom_call.1}
  #allocation0 [shape = 'u32[]', space=smem, size = 0x4, offset = 0x4, fixed_abs, tag = 'smem constant byte address 0x4 - core index']
  #allocation1 [shape = 'u32[144,128]{1,0:T(1,128)}', space=vmem, size = 0x12000, scoped, tag = 'internal scratch']
  #allocation2 [shape = 'f32[8,128]{1,0:T(8,128)}', space=vmem, size = 0x1000, scoped, tag = 'scratch operand']
  %s0 = inlined_call_operand.hbm [shape: f32[16,128], index: 0, kind: input, shape index: {}]
  %s1 = inlined_call_operand.hbm [shape: f32[16,128], index: 1, kind: input, shape index: {}]
  %s2 = inlined_call_operand.hbm [shape: f32[1,1], index: 2, kind: output, shape index: {}]
  %s3 = sld [smem:[#allocation0]]
  $region34: #{tpu_custom_call.1} parent=0
    _
  %s5 = ssub.s32 1, %s3
  %s6 = scalar_select 0, %s5, %s3
  $region1: #{tpu_custom_call.1} parent=0
    #allocation3 [shape = 'u8[8192]{0}', space=vmem, size = 0x2000, scoped, tag = 'input window, operand 0, single buffered']
    #allocation4 [shape = 's32[1]{0}', space=sflag, size = 0x4, scoped, tag = 'scoped memory for tpu_custom_call.1']
    #allocation5 [shape = 's32[1]{0}', space=sflag, size = 0x4, scoped, tag = 'scoped memory for tpu_custom_call.1']
    #allocation6 [shape = 'u8[8192]{0}', space=vmem, size = 0x2000, scoped, tag = 'input window, operand 1, single buffered']
    #allocation7 [shape = 's32[1]{0}', space=sflag, size = 0x4, scoped, tag = 'scoped memory for tpu_custom_call.1']
    #allocation8 [shape = 'u8[512]{0}', space=smem, size = 0x200, scoped, tag = 'output window, operand 0, single buffered']
    %7 = vsyncpa [#allocation4], 0
    %8 = vsyncpa [#allocation7], 0
    %9 = vsyncpa [#allocation5], 0
    // Predicated region
    $region2: #{tpu_custom_call.1} parent=1 // pred_check
      _
    $region3: #{tpu_custom_call.1} parent=1 // pred_check_branch
      %11 = sbr.rel (0) target = $region5
    $region4: #{tpu_custom_call.1} parent=1 // pred_region
      %s12 = sadd.s32 0, 0
      %s13 = smul.u32 2, %s12
      %s15 = ssub.s32 256, 256
      %16 = vsyncadd [#allocation4], %s15
      %s17 = smul.addr %s13, 128
      %s18 = scalar_lea.hbm %s0, %s17
      %s19 = sshll.u32 [#allocation3], 4
      %s20 = int_to_ptr.vmem [resolvable:$true] %s19
      %25 = dma.hbm_to_vmem [thread:$0]  %s18, 256, %s20, [#allocation4], 128, 128, 8
    $region5: #{tpu_custom_call.1} parent=1 // pred_fallthru
      _
    // Predicated region
    $region6: #{tpu_custom_call.1} parent=1 // pred_check
      _
    $region7: #{tpu_custom_call.1} parent=1 // pred_check_branch
      %27 = sbr.rel (0) target = $region9
    $region8: #{tpu_custom_call.1} parent=1 // pred_region
      %s28 = sadd.s32 0, 0
      %s29 = smul.u32 2, %s28
      %s31 = ssub.s32 256, 256
      %32 = vsyncadd [#allocation7], %s31
      %s33 = smul.addr %s29, 128
      %s34 = scalar_lea.hbm %s1, %s33
      %s35 = sshll.u32 [#allocation6], 4
      %s36 = int_to_ptr.vmem [resolvable:$true] %s35
      %41 = dma.hbm_to_vmem [thread:$0]  %s34, 256, %s36, [#allocation7], 128, 128, 8
    $region9: #{tpu_custom_call.1} parent=1 // pred_fallthru
      _
    // Predicated region
    $region10: #{tpu_custom_call.1} parent=1 // pred_check
      _
    $region11: #{tpu_custom_call.1} parent=1 // pred_check_branch
      %43 = sbr.rel (0) target = $region13
    $region12: #{tpu_custom_call.1} parent=1 // pred_region
      %44 = dma.done [#allocation4], 256
    $region13: #{tpu_custom_call.1} parent=1 // pred_fallthru
      _
    // Predicated region
    $region14: #{tpu_custom_call.1} parent=1 // pred_check
      _
    $region15: #{tpu_custom_call.1} parent=1 // pred_check_branch
      %46 = sbr.rel (0) target = $region17
    $region16: #{tpu_custom_call.1} parent=1 // pred_region
      %47 = dma.done [#allocation7], 256
    $region17: #{tpu_custom_call.1} parent=1 // pred_fallthru
      _
    %s48 = sadd.s32 0, 0
    %s49 = smul.u32 2, %s48
    %s50 = sadd.s32 0, 0
    %s51 = smul.u32 2, %s50
    %p52 = scmp.eq.s32.totalorder 0, 0
    // Predicated region
    $region18: #{tpu_custom_call.1} parent=1 // pred_check
      %p53 = pneg %p52
    $region19: #{tpu_custom_call.1} parent=1 // pred_check_branch
      %55 = sbr.rel (%p53) target = $region21
    $region20: #{tpu_custom_call.1} parent=1 // pred_region
      %56 = vst [vmem:[#allocation2] sm:$0xff] 0.0
    $region21: #{tpu_custom_call.1} parent=1 // pred_fallthru
      _
    %v57 = vld [vmem:[#allocation3] sm:$0xff]
    %v58 = vld [vmem:[#allocation3 + $0x8] sm:$0xff]
    %v59 = vld [vmem:[#allocation6] sm:$0xff]
    %v60 = vld [vmem:[#allocation6 + $0x8] sm:$0xff]
    %v61 = vadd.f32 %v59, 1.0
    %v62 = vadd.f32 %v60, 1.0
    %v63 = vmul.f32 %v57, %v57
    %v64 = vmul.f32 %v58, %v58
    %v65 = vsub.f32 %v61, %v63
    %v66 = vsub.f32 %v62, %v64
    %v67 = vmul.f32 %v59, 1.442695
    %v68 = vpow.pop %v67
    %v69 = vmul.f32 %v60, 1.442695
    %v70 = vpow.pop %v69
    %v71 = vsub.f32 %v65, %v68
    %v72 = vsub.f32 %v66, %v70
    %v73 = vld [vmem:[#allocation2] sm:$0xff]
    %v74 = vadd.f32 %v71, %v72
    %v75 = vadd.f32 %v73, %v74
    %76 = vst [vmem:[#allocation2] sm:$0xff] %v75
    // Predicated region
    $region22: #{tpu_custom_call.1} parent=1 // pred_check
      %p77 = pneg %p52
    $region23: #{tpu_custom_call.1} parent=1 // pred_check_branch
      %79 = sbr.rel (%p77) target = $region25
    $region24: #{tpu_custom_call.1} parent=1 // pred_region
      %v80 = vld [vmem:[#allocation2] sm:$0xff]
      %81 = vadd.xlane.f32.xlu0 %v80
      %v82 = vpop.xlane.xlu0 %81
      %v83 = vrot.slane %v82, 4
      %v84 = vadd.f32 %v82, %v83
      %v85 = vrot.slane %v84, 2
      %v86 = vadd.f32 %v84, %v85
      %v87 = vrot.slane %v86, 1
      %v88 = vadd.f32 %v86, %v87
      %s89 = vtos %v88
      %s90 = smul.f32 %s89, -0.00024414063
      %s91 = scalar_lea.smem [#allocation8], 0
      %92 = sst [smem:[%s91]] %s90
    $region25: #{tpu_custom_call.1} parent=1 // pred_fallthru
      _
    // Predicated region
    $region26: #{tpu_custom_call.1} parent=1 // pred_check
      _
    $region27: #{tpu_custom_call.1} parent=1 // pred_check_branch
      %94 = sbr.rel (0) target = $region29
    $region28: #{tpu_custom_call.1} parent=1 // pred_region
      %s96 = ssub.s32 16, 16
      %97 = vsyncadd [#allocation5], %s96
      %100 = dma.smem_to_hbm [#allocation8], 16, %s2, [#allocation5]
    $region29: #{tpu_custom_call.1} parent=1 // pred_fallthru
      _
    // Predicated region
    $region30: #{tpu_custom_call.1} parent=1 // pred_check
      _
    $region31: #{tpu_custom_call.1} parent=1 // pred_check_branch
      %102 = sbr.rel (0) target = $region33
    $region32: #{tpu_custom_call.1} parent=1 // pred_region
      %103 = dma.done [#allocation5], 16
    $region33: #{tpu_custom_call.1} parent=1 // pred_fallthru
      _
    %104 = sfence
    %105 = vsyncpa [#allocation4], 1
    %106 = vsyncpa [#allocation7], 1
    %107 = vsyncpa [#allocation5], 1

</llo_original>
